<compile_context>
chip_gen: v6e
topology: v6e:2x2x1
jax: 0.10.0
libtpu: 0.0.40
codegen_flags: <defaults>
</compile_context>

<pallas_src>
import jax
import jax.numpy as jnp
from jax import lax
from jax.experimental import pallas as pl
from jax.experimental.pallas import tpu as pltpu

LANE = 128


# ----------------------------------------------------------------------------
# Host/trace-time helper: dense Toeplitz (im2col) matrix for a valid conv.
# ----------------------------------------------------------------------------
def conv2d_toeplitz(w, in_h, in_w):
    """K with K @ x.reshape(-1) == valid_conv2d(x, w).reshape(-1) (row-major)."""
    kh, kw = w.shape
    oh, ow = in_h - kh + 1, in_w - kw + 1
    oy = jnp.arange(oh)[:, None]
    ox = jnp.arange(ow)[None, :]
    orow = (oy * ow + ox).reshape(-1)                       # (oh*ow,)
    K = jnp.zeros((oh * ow, in_h * in_w), jnp.float32)
    for p in range(kh):                                     # <=25 taps, trace-time unroll
        for q in range(kw):
            icol = ((oy + p) * in_w + (ox + q)).reshape(-1)
            K = K.at[orow, icol].add(w[p, q])
    return K


# ----------------------------------------------------------------------------
# Pallas kernel: one batch tile of TB samples, everything lane-dense.
# ----------------------------------------------------------------------------
def net_kernel(x_ref, k1_ref, k2_ref, lw1_ref, lw2_ref,
               cb_ref, lb1_ref, lb2_ref, out_ref):
    # conv_1 as Toeplitz matmul + ReLU, contracting on x's last (natural) dim:
    #   (36,100) x (TB,100)^T -> (36,TB)   (batch rides the lane axis)
    h1 = lax.dot_general(
        k1_ref[...], x_ref[...],
        dimension_numbers=(((1,), (1,)), ((), ())),
        preferred_element_type=jnp.float32)
    h1 = jnp.maximum(h1 + cb_ref[0], 0.0)

    # conv_2 as Toeplitz matmul + ReLU:  (16,36) @ (36,TB) -> (16,TB)
    h2 = jnp.dot(k2_ref[...], h1, preferred_element_type=jnp.float32)
    h2 = jnp.maximum(h2 + cb_ref[1], 0.0)

    # Linear_1 + ReLU:  (8,16) @ (16,TB) -> (8,TB)  (row order matches .view)
    z1 = jnp.dot(lw1_ref[...], h2, preferred_element_type=jnp.float32)
    z1 = jnp.maximum(z1 + lb1_ref[...], 0.0)

    # Linear_2:  (4,8) @ (8,TB) -> (4,TB)
    out = jnp.dot(lw2_ref[...], z1, preferred_element_type=jnp.float32)
    out_ref[...] = out + lb2_ref[...]


# ----------------------------------------------------------------------------
# Wrapper: adaptive batch tiling, Toeplitz build, pallas_call.
# ----------------------------------------------------------------------------
def net_forward_pallas(x_nchw, params, *, max_tb=8192):
    """x_nchw: (B, 1, 10, 10) float32; returns (B, 4) float32."""
    w1, b1, w2, b2, lw1, lb1, lw2, lb2 = params
    B = x_nchw.shape[0]

    # Natural batch-major layout, no transpose pass: (B,1,10,10) -> (B, 100).
    x2d = x_nchw.reshape(B, 100).astype(jnp.float32)

    # Dense conv matrices (tiny: 36x100 and 16x36) + merged conv biases.
    K1 = conv2d_toeplitz(w1, 10, 10)                        # (36, 100)
    K2 = conv2d_toeplitz(w2, 6, 6)                          # (16, 36)
    cb = jnp.concatenate([b1, b2]).astype(jnp.float32)      # (2,) SMEM scalars

    # Adaptive batch tile:
    #   * TB multiple of 128, capped at max_tb (keeps 2x double-buffered x tile
    #     << 16 MiB so v5e/v6e/v7x default scoped VMEM all fit).
    #   * >= 2 grid steps whenever B > 128 (both v7x TensorCores get work).
    #   * TB sized from the actual batch to minimize padding waste.
    n_blocks = pl.cdiv(B, LANE)
    max_blocks = max(1, max_tb // LANE)
    min_steps = 2 if n_blocks >= 2 else 1
    steps = max(min_steps, pl.cdiv(n_blocks, max_blocks))
    blocks_per_step = pl.cdiv(n_blocks, steps)
    TB = LANE * blocks_per_step
    steps = max(min_steps, pl.cdiv(n_blocks, blocks_per_step))
    Bp = steps * TB
    if Bp != B:
        x2d = jnp.pad(x2d, ((0, Bp - B), (0, 0)))
    grid = (steps,)

    vmem_const = lambda shape: pl.BlockSpec(shape, lambda i: (0, 0))
    smem = pl.BlockSpec(memory_space=pltpu.MemorySpace.SMEM)

    flops = 2 * Bp * (36 * 100 + 16 * 36 + 8 * 16 + 4 * 8)
    bytes_accessed = (Bp * (100 + 4) * 4
                      + (36 * 100 + 16 * 36 + 8 * 16 + 4 * 8 + 14) * 4)

    out_p = pl.pallas_call(
        net_kernel,
        out_shape=jax.ShapeDtypeStruct((4, Bp), jnp.float32),
        grid=grid,
        in_specs=[
            pl.BlockSpec((TB, 100), lambda i: (i, 0)),      # x tile (natural layout)
            vmem_const((36, 100)),                          # K1
            vmem_const((16, 36)),                           # K2
            vmem_const((8, 16)),                            # Linear_1 weight
            vmem_const((4, 8)),                             # Linear_2 weight
            smem,                                           # conv biases (2,)
            vmem_const((8, 1)),                             # Linear_1 bias (column)
            vmem_const((4, 1)),                             # Linear_2 bias (column)
        ],
        out_specs=pl.BlockSpec((4, TB), lambda i: (0, i)),
        compiler_params=pltpu.CompilerParams(
            dimension_semantics=("parallel",)),
        cost_estimate=pl.CostEstimate(
            flops=flops, transcendentals=0, bytes_accessed=bytes_accessed),
    )(x2d,
      K1, K2,
      lw1, lw2,
      cb,
      lb1.reshape(8, 1), lb2.reshape(4, 1))

    # Padded columns hold bias+ReLU garbage — the :B slice is required.
    return out_p[:, :B].T                                   # (B, 4)


# ----------------------------------------------------------------------------
# Pure-JAX reference matching the PyTorch forward.
# ----------------------------------------------------------------------------
def net_forward_ref(x_nchw, params):
    w1, b1, w2, b2, lw1, lb1, lw2, lb2 = params
    y = lax.conv_general_dilated(
        x_nchw, w1.reshape(1, 1, 5, 5), (1, 1), 'VALID',
        dimension_numbers=('NCHW', 'OIHW', 'NCHW'))
    y = jax.nn.relu(y + b1)
    y = lax.conv_general_dilated(
        y, w2.reshape(1, 1, 3, 3), (1, 1), 'VALID',
        dimension_numbers=('NCHW', 'OIHW', 'NCHW'))
    y = jax.nn.relu(y + b2)
    flat = y.reshape(y.shape[0], -1)                        # (B, 16)
    z1 = jax.nn.relu(flat @ lw1.T + lb1)                    # (B, 8)
    return z1 @ lw2.T + lb2                                 # (B, 4)


def make_params(key):
    """Deterministic synthetic parameters with the module's shapes."""
    ks = jax.random.split(key, 8)
    w1 = 0.1 * jax.random.normal(ks[0], (5, 5), jnp.float32)    # conv_1.weight (1,1,5,5)
    b1 = 0.1 * jax.random.normal(ks[1], (1,), jnp.float32)      # conv_1.bias
    w2 = 0.1 * jax.random.normal(ks[2], (3, 3), jnp.float32)    # conv_2.weight (1,1,3,3)
    b2 = 0.1 * jax.random.normal(ks[3], (1,), jnp.float32)      # conv_2.bias
    lw1 = 0.1 * jax.random.normal(ks[4], (8, 16), jnp.float32)  # Linear_1.weight ~ N(0,0.1)
    lb1 = 0.1 * jax.random.normal(ks[5], (8,), jnp.float32)     # Linear_1.bias
    lw2 = 0.1 * jax.random.normal(ks[6], (4, 8), jnp.float32)   # Linear_2.weight ~ N(0,0.1)
    lb2 = 0.1 * jax.random.normal(ks[7], (4,), jnp.float32)     # Linear_2.bias
    return (w1, b1, w2, b2, lw1, lb1, lw2, lb2)


if __name__ == "__main__":
    key = jax.random.PRNGKey(0)
    pkey, xkey1, xkey2 = jax.random.split(key, 3)
    params = make_params(pkey)

    # Small case: batch=2, channels=1, spatial=10x10 (single-step grid).
    x_small = jax.random.normal(xkey1, (2, 1, 10, 10), jnp.float32)
    out_small = jax.block_until_ready(net_forward_pallas(x_small, params))
    ref_small = net_forward_ref(x_small, params)
    assert out_small.shape == (2, 4), out_small.shape
    assert jnp.allclose(out_small, ref_small, atol=1e-4, rtol=1e-4), (out_small, ref_small)

    # Ragged case: batch=300 exercises the multi-step parallel grid + padding.
    x_big = jax.random.normal(xkey2, (300, 1, 10, 10), jnp.float32)
    out_big = jax.block_until_ready(net_forward_pallas(x_big, params))
    ref_big = net_forward_ref(x_big, params)
    assert out_big.shape == (300, 4), out_big.shape
    assert jnp.allclose(out_big, ref_big, atol=1e-4, rtol=1e-4)

    print("KERNEL_OK")
</pallas_src>

<mosaic_0001>
module attributes {stable_mosaic.version = 11 : i64} {
  func.func @net_kernel(%arg0: i32, %arg1: memref<128x100xf32, #tpu.memory_space<vmem>>, %arg2: memref<36x100xf32, #tpu.memory_space<vmem>>, %arg3: memref<16x36xf32, #tpu.memory_space<vmem>>, %arg4: memref<8x16xf32, #tpu.memory_space<vmem>>, %arg5: memref<4x8xf32, #tpu.memory_space<vmem>>, %arg6: memref<2xf32, #tpu.memory_space<smem>>, %arg7: memref<8x1xf32, #tpu.memory_space<vmem>>, %arg8: memref<4x1xf32, #tpu.memory_space<vmem>>, %arg9: memref<4x128xf32, #tpu.memory_space<vmem>>) attributes {dimension_semantics = [#tpu.dimension_semantics<parallel>], iteration_bounds = array<i64: 1>, scalar_prefetch = 0 : i64, scratch_operands = 0 : i64, tpu.core_type = #tpu.core_type<tc>, window_params = [{transform_indices = @transform_0, window_bounds = array<i64: 128, 100>}, {pipeline_mode = #tpu.pipeline_mode<synchronous>, transform_indices = @transform_1, window_bounds = array<i64: 36, 100>}, {pipeline_mode = #tpu.pipeline_mode<synchronous>, transform_indices = @transform_2, window_bounds = array<i64: 16, 36>}, {pipeline_mode = #tpu.pipeline_mode<synchronous>, transform_indices = @transform_3, window_bounds = array<i64: 8, 16>}, {pipeline_mode = #tpu.pipeline_mode<synchronous>, transform_indices = @transform_4, window_bounds = array<i64: 4, 8>}, {transform_indices = @transform_5, window_bounds = array<i64: 2>}, {pipeline_mode = #tpu.pipeline_mode<synchronous>, transform_indices = @transform_6, window_bounds = array<i64: 8, 1>}, {pipeline_mode = #tpu.pipeline_mode<synchronous>, transform_indices = @transform_7, window_bounds = array<i64: 4, 1>}, {transform_indices = @transform_8, window_bounds = array<i64: 4, 128>}]} {
    %c0 = arith.constant 0 : index
    %c0_0 = arith.constant 0 : index
    %0 = vector.load %arg2[%c0, %c0_0] : memref<36x100xf32, #tpu.memory_space<vmem>>, vector<36x100xf32>
    %c0_1 = arith.constant 0 : index
    %c0_2 = arith.constant 0 : index
    %1 = vector.load %arg1[%c0_1, %c0_2] : memref<128x100xf32, #tpu.memory_space<vmem>>, vector<128x100xf32>
    %cst = arith.constant dense<0.000000e+00> : vector<36x128xf32>
    %2 = tpu.matmul %0, %1, %cst {dimension_numbers = #tpu.dot_dimension_numbers<[1], [1], [0], [0], [0, 0, 1, 0], [], []>} : vector<36x100xf32>, vector<128x100xf32>, vector<36x128xf32> -> vector<36x128xf32>
    %c0_3 = arith.constant 0 : index
    %3 = memref.load %arg6[%c0_3] : memref<2xf32, #tpu.memory_space<smem>>
    %4 = vector.broadcast %3 : f32 to vector<36x128xf32>
    %5 = arith.addf %2, %4 : vector<36x128xf32>
    %cst_4 = arith.constant 0.000000e+00 : f32
    %6 = vector.broadcast %cst_4 : f32 to vector<36x128xf32>
    %7 = arith.maximumf %5, %6 : vector<36x128xf32>
    %c0_5 = arith.constant 0 : index
    %c0_6 = arith.constant 0 : index
    %8 = vector.load %arg3[%c0_5, %c0_6] : memref<16x36xf32, #tpu.memory_space<vmem>>, vector<16x36xf32>
    %cst_7 = arith.constant dense<0.000000e+00> : vector<16x128xf32>
    %9 = tpu.matmul %8, %7, %cst_7 {dimension_numbers = #tpu.dot_dimension_numbers<[1], [0], [0], [1], [0, 0, 1, 1], [], []>} : vector<16x36xf32>, vector<36x128xf32>, vector<16x128xf32> -> vector<16x128xf32>
    %c1 = arith.constant 1 : index
    %10 = memref.load %arg6[%c1] : memref<2xf32, #tpu.memory_space<smem>>
    %11 = vector.broadcast %10 : f32 to vector<16x128xf32>
    %12 = arith.addf %9, %11 : vector<16x128xf32>
    %cst_8 = arith.constant 0.000000e+00 : f32
    %13 = vector.broadcast %cst_8 : f32 to vector<16x128xf32>
    %14 = arith.maximumf %12, %13 : vector<16x128xf32>
    %c0_9 = arith.constant 0 : index
    %c0_10 = arith.constant 0 : index
    %15 = vector.load %arg4[%c0_9, %c0_10] : memref<8x16xf32, #tpu.memory_space<vmem>>, vector<8x16xf32>
    %cst_11 = arith.constant dense<0.000000e+00> : vector<8x128xf32>
    %16 = tpu.matmul %15, %14, %cst_11 {dimension_numbers = #tpu.dot_dimension_numbers<[1], [0], [0], [1], [0, 0, 1, 1], [], []>} : vector<8x16xf32>, vector<16x128xf32>, vector<8x128xf32> -> vector<8x128xf32>
    %c0_12 = arith.constant 0 : index
    %c0_13 = arith.constant 0 : index
    %17 = vector.load %arg7[%c0_12, %c0_13] : memref<8x1xf32, #tpu.memory_space<vmem>>, vector<8x1xf32>
    %18 = vector.broadcast %17 : vector<8x1xf32> to vector<8x128xf32>
    %19 = arith.addf %16, %18 : vector<8x128xf32>
    %cst_14 = arith.constant 0.000000e+00 : f32
    %20 = vector.broadcast %cst_14 : f32 to vector<8x128xf32>
    %21 = arith.maximumf %19, %20 : vector<8x128xf32>
    %c0_15 = arith.constant 0 : index
    %c0_16 = arith.constant 0 : index
    %22 = vector.load %arg5[%c0_15, %c0_16] : memref<4x8xf32, #tpu.memory_space<vmem>>, vector<4x8xf32>
    %cst_17 = arith.constant dense<0.000000e+00> : vector<4x128xf32>
    %23 = tpu.matmul %22, %21, %cst_17 {dimension_numbers = #tpu.dot_dimension_numbers<[1], [0], [0], [1], [0, 0, 1, 1], [], []>} : vector<4x8xf32>, vector<8x128xf32>, vector<4x128xf32> -> vector<4x128xf32>
    %c0_18 = arith.constant 0 : index
    %c0_19 = arith.constant 0 : index
    %24 = vector.load %arg8[%c0_18, %c0_19] : memref<4x1xf32, #tpu.memory_space<vmem>>, vector<4x1xf32>
    %25 = vector.broadcast %24 : vector<4x1xf32> to vector<4x128xf32>
    %26 = arith.addf %23, %25 : vector<4x128xf32>
    %c0_20 = arith.constant 0 : index
    %c0_21 = arith.constant 0 : index
    %27 = vector.load %arg9[%c0_20, %c0_21] : memref<4x128xf32, #tpu.memory_space<vmem>>, vector<4x128xf32>
    tpu.vector_store %arg9[%c0_20, %c0_21], %26 {strides = array<i32>} : memref<4x128xf32, #tpu.memory_space<vmem>>, vector<4x128xf32>,
    return
  }
  func.func @transform_0(%arg0: i32) -> (i32, i32) {
    %c0_i32 = arith.constant 0 : i32
    %c0_i32_0 = arith.constant 0 : i32
    return %arg0, %c0_i32 : i32, i32
  }
  func.func @transform_1(%arg0: i32) -> (i32, i32) {
    %c0_i32 = arith.constant 0 : i32
    %c0_i32_0 = arith.constant 0 : i32
    %c0_i32_1 = arith.constant 0 : i32
    return %c0_i32, %c0_i32_0 : i32, i32
  }
  func.func @transform_2(%arg0: i32) -> (i32, i32) {
    %c0_i32 = arith.constant 0 : i32
    %c0_i32_0 = arith.constant 0 : i32
    %c0_i32_1 = arith.constant 0 : i32
    return %c0_i32, %c0_i32_0 : i32, i32
  }
  func.func @transform_3(%arg0: i32) -> (i32, i32) {
    %c0_i32 = arith.constant 0 : i32
    %c0_i32_0 = arith.constant 0 : i32
    %c0_i32_1 = arith.constant 0 : i32
    return %c0_i32, %c0_i32_0 : i32, i32
  }
  func.func @transform_4(%arg0: i32) -> (i32, i32) {
    %c0_i32 = arith.constant 0 : i32
    %c0_i32_0 = arith.constant 0 : i32
    %c0_i32_1 = arith.constant 0 : i32
    return %c0_i32, %c0_i32_0 : i32, i32
  }
  func.func @transform_5(%arg0: i32) -> i32 {
    %c0_i32 = arith.constant 0 : i32
    %c0_i32_0 = arith.constant 0 : i32
    return %c0_i32 : i32
  }
  func.func @transform_6(%arg0: i32) -> (i32, i32) {
    %c0_i32 = arith.constant 0 : i32
    %c0_i32_0 = arith.constant 0 : i32
    %c0_i32_1 = arith.constant 0 : i32
    return %c0_i32, %c0_i32_0 : i32, i32
  }
  func.func @transform_7(%arg0: i32) -> (i32, i32) {
    %c0_i32 = arith.constant 0 : i32
    %c0_i32_0 = arith.constant 0 : i32
    %c0_i32_1 = arith.constant 0 : i32
    return %c0_i32, %c0_i32_0 : i32, i32
  }
  func.func @transform_8(%arg0: i32) -> (i32, i32) {
    %c0_i32 = arith.constant 0 : i32
    %c0_i32_0 = arith.constant 0 : i32
    return %c0_i32, %arg0 : i32, i32
  }
}

</mosaic_0001>

<llo_original>
// kernel: tpu_custom_call.1
$region0: #{tpu_custom_call.1}
  #allocation0 [shape = 'u32[]', space=smem, size = 0x4, offset = 0x4, fixed_abs, tag = 'smem constant byte address 0x4 - core index']
  #allocation1 [shape = 'u32[144,128]{1,0:T(1,128)}', space=vmem, size = 0x12000, scoped, tag = 'internal scratch']
  %s0 = inlined_call_operand.vmem [shape: f32[128,100], index: 0, kind: input, shape index: {}]
  %s1 = inlined_call_operand.vmem [shape: f32[36,100], index: 1, kind: input, shape index: {}]
  %s2 = inlined_call_operand.vmem [shape: f32[16,36], index: 2, kind: input, shape index: {}]
  %s3 = inlined_call_operand.vmem [shape: f32[8,16], index: 3, kind: input, shape index: {}]
  %s4 = inlined_call_operand.vmem [shape: f32[4,8], index: 4, kind: input, shape index: {}]
  %s5 = inlined_call_operand.vmem [shape: f32[2], index: 5, kind: input, shape index: {}]
  %s6 = inlined_call_operand.vmem [shape: f32[8,1], index: 6, kind: input, shape index: {}]
  %s7 = inlined_call_operand.vmem [shape: f32[4,1], index: 7, kind: input, shape index: {}]
  %s8 = inlined_call_operand.hbm [shape: f32[4,128], index: 8, kind: output, shape index: {}]
  %s9 = sld [smem:[#allocation0]]
  $region46: #{tpu_custom_call.1} parent=0
    _
  %s11 = ssub.s32 1, %s9
  %s12 = scalar_select 0, %s11, %s9
  $region1: #{tpu_custom_call.1} parent=0
    #allocation2 [shape = 'u8[512]{0}', space=smem, size = 0x200, scoped, tag = 'input window, operand 5, single buffered']
    #allocation3 [shape = 's32[1]{0}', space=sflag, size = 0x4, scoped, tag = 'scoped memory for tpu_custom_call.1']
    #allocation4 [shape = 's32[1]{0}', space=sflag, size = 0x4, scoped, tag = 'scoped memory for tpu_custom_call.1']
    #allocation5 [shape = 'u8[2048]{0}', space=vmem, size = 0x800, scoped, tag = 'output window, operand 0, single buffered']
    %13 = vsyncpa [#allocation4], 0
    %14 = vsyncpa [#allocation3], 0
    // Predicated region
    $region2: #{tpu_custom_call.1} parent=1 // pred_check
      _
    $region3: #{tpu_custom_call.1} parent=1 // pred_check_branch
      %16 = sbr.rel (0) target = $region5
    $region4: #{tpu_custom_call.1} parent=1 // pred_region
      _
    $region5: #{tpu_custom_call.1} parent=1 // pred_fallthru
      _
    // Predicated region
    $region6: #{tpu_custom_call.1} parent=1 // pred_check
      _
    $region7: #{tpu_custom_call.1} parent=1 // pred_check_branch
      %18 = sbr.rel (0) target = $region9
    $region8: #{tpu_custom_call.1} parent=1 // pred_region
      _
    $region9: #{tpu_custom_call.1} parent=1 // pred_fallthru
      _
    // Predicated region
    $region10: #{tpu_custom_call.1} parent=1 // pred_check
      _
    $region11: #{tpu_custom_call.1} parent=1 // pred_check_branch
      %20 = sbr.rel (0) target = $region13
    $region12: #{tpu_custom_call.1} parent=1 // pred_region
      _
    $region13: #{tpu_custom_call.1} parent=1 // pred_fallthru
      _
    // Predicated region
    $region14: #{tpu_custom_call.1} parent=1 // pred_check
      _
    $region15: #{tpu_custom_call.1} parent=1 // pred_check_branch
      %22 = sbr.rel (0) target = $region17
    $region16: #{tpu_custom_call.1} parent=1 // pred_region
      _
    $region17: #{tpu_custom_call.1} parent=1 // pred_fallthru
      _
    // Predicated region
    $region18: #{tpu_custom_call.1} parent=1 // pred_check
      _
    $region19: #{tpu_custom_call.1} parent=1 // pred_check_branch
      %24 = sbr.rel (0) target = $region21
    $region20: #{tpu_custom_call.1} parent=1 // pred_region
      _
    $region21: #{tpu_custom_call.1} parent=1 // pred_fallthru
      _
    // Predicated region
    $region22: #{tpu_custom_call.1} parent=1 // pred_check
      _
    $region23: #{tpu_custom_call.1} parent=1 // pred_check_branch
      %26 = sbr.rel (0) target = $region25
    $region24: #{tpu_custom_call.1} parent=1 // pred_region
      %s28 = ssub.s32 16, 16
      %29 = vsyncadd [#allocation4], %s28
      %s31 = sshll.u32 %s5, 4
      %s32 = int_to_ptr.vmem [resolvable:$true] %s31
      %34 = dma.vmem_to_smem %s32, 16, [#allocation2], [#allocation4]
    $region25: #{tpu_custom_call.1} parent=1 // pred_fallthru
      _
    // Predicated region
    $region26: #{tpu_custom_call.1} parent=1 // pred_check
      _
    $region27: #{tpu_custom_call.1} parent=1 // pred_check_branch
      %36 = sbr.rel (0) target = $region29
    $region28: #{tpu_custom_call.1} parent=1 // pred_region
      _
    $region29: #{tpu_custom_call.1} parent=1 // pred_fallthru
      _
    // Predicated region
    $region30: #{tpu_custom_call.1} parent=1 // pred_check
      _
    $region31: #{tpu_custom_call.1} parent=1 // pred_check_branch
      %38 = sbr.rel (0) target = $region33
    $region32: #{tpu_custom_call.1} parent=1 // pred_region
      _
    $region33: #{tpu_custom_call.1} parent=1 // pred_fallthru
      _
    // Predicated region
    $region34: #{tpu_custom_call.1} parent=1 // pred_check
      _
    $region35: #{tpu_custom_call.1} parent=1 // pred_check_branch
      %40 = sbr.rel (0) target = $region37
    $region36: #{tpu_custom_call.1} parent=1 // pred_region
      %41 = dma.done [#allocation4], 16
    $region37: #{tpu_custom_call.1} parent=1 // pred_fallthru
      _
    %42 = sfence
    %v43 = vld [vmem:[%s1] sm:$0xff]
    %v44 = vld [vmem:[%s1 + $0x8] sm:$0xff]
    %v45 = vld [vmem:[%s1 + $0x10] sm:$0xff]
    %v46 = vld [vmem:[%s1 + $0x18] sm:$0xff]
    %v47 = vld [vmem:[%s1 + $0x20] sm:$0xf]
    %v48 = vld [vmem:[%s0] sm:$0xff]
    %v49 = vld [vmem:[%s0 + $0x8] sm:$0xff]
    %v50 = vld [vmem:[%s0 + $0x10] sm:$0xff]
    %v51 = vld [vmem:[%s0 + $0x18] sm:$0xff]
    %v52 = vld [vmem:[%s0 + $0x20] sm:$0xff]
    %v53 = vld [vmem:[%s0 + $0x28] sm:$0xff]
    %v54 = vld [vmem:[%s0 + $0x30] sm:$0xff]
    %v55 = vld [vmem:[%s0 + $0x38] sm:$0xff]
    %v56 = vld [vmem:[%s0 + $0x40] sm:$0xff]
    %v57 = vld [vmem:[%s0 + $0x48] sm:$0xff]
    %v58 = vld [vmem:[%s0 + $0x50] sm:$0xff]
    %v59 = vld [vmem:[%s0 + $0x58] sm:$0xff]
    %v60 = vld [vmem:[%s0 + $0x60] sm:$0xff]
    %v61 = vld [vmem:[%s0 + $0x68] sm:$0xff]
    %v62 = vld [vmem:[%s0 + $0x70] sm:$0xff]
    %v63 = vld [vmem:[%s0 + $0x78] sm:$0xff]
    %s64 = sld [smem:[#allocation2]]
    %v65 = vstv %s64
    %vm66 = vcmask 818176
    %v68 = vsel %vm66, %v43, 0
    %v71 = vsel %vm66, %v44, 0
    %v74 = vsel %vm66, %v45, 0
    %v77 = vsel %vm66, %v46, 0
    %v80 = vsel %vm66, %v47, 0
    %v83 = vsel %vm66, %v48, 0
    %v86 = vsel %vm66, %v49, 0
    %v89 = vsel %vm66, %v50, 0
    %v92 = vsel %vm66, %v51, 0
    %v95 = vsel %vm66, %v52, 0
    %v98 = vsel %vm66, %v53, 0
    %v101 = vsel %vm66, %v54, 0
    %v104 = vsel %vm66, %v55, 0
    %v107 = vsel %vm66, %v56, 0
    %v110 = vsel %vm66, %v57, 0
    %v113 = vsel %vm66, %v58, 0
    %v116 = vsel %vm66, %v59, 0
    %v119 = vsel %vm66, %v60, 0
    %v122 = vsel %vm66, %v61, 0
    %v125 = vsel %vm66, %v62, 0
    %v128 = vsel %vm66, %v63, 0
    %130 = vmatprep.subr.mxu0 0.0
    %131 = vmatpush1.xpose.msra.mxu0 %v128
    %132 = vmatprep.subr.mxu0 0.0
    %133 = vmatpush1.xpose.msra.mxu0 %v125
    %134 = vmatprep.subr.mxu0 0.0
    %135 = vmatpush1.xpose.msra.mxu0 %v122
    %136 = vmatprep.subr.mxu0 0.0
    %137 = vmatpush1.xpose.msra.mxu0 %v119
    %138 = vmatprep.subr.mxu0 0.0
    %139 = vmatpush1.xpose.msra.mxu0 %v116
    %140 = vmatprep.subr.mxu0 0.0
    %141 = vmatpush1.xpose.msra.mxu0 %v113
    %142 = vmatprep.subr.mxu0 0.0
    %143 = vmatpush1.xpose.msra.mxu0 %v110
    %144 = vmatprep.subr.mxu0 0.0
    %145 = vmatpush1.xpose.msra.mxu0 %v107
    %146 = vmatprep.subr.mxu0 0.0
    %147 = vmatpush1.xpose.msra.mxu0 %v104
    %148 = vmatprep.subr.mxu0 0.0
    %149 = vmatpush1.xpose.msra.mxu0 %v101
    %150 = vmatprep.subr.mxu0 0.0
    %151 = vmatpush1.xpose.msra.mxu0 %v98
    %152 = vmatprep.subr.mxu0 0.0
    %153 = vmatpush1.xpose.msra.mxu0 %v95
    %154 = vmatprep.subr.mxu0 0.0
    %155 = vmatpush1.xpose.msra.mxu0 %v92
    %156 = vmatprep.subr.mxu0 0.0
    %157 = vmatpush1.xpose.msra.mxu0 %v89
    %158 = vmatprep.subr.mxu0 0.0
    %159 = vmatpush1.xpose.msra.mxu0 %v86
    %160 = vmatprep.subr.mxu0 0.0
    %161 = vmatpush1.xpose.msra.mxu0 %v83
    %162 = vmatprep.subr.mxu0 0.0
    %163 = vmatpush2.xpose.msra.mxu0 0.0
    %164 = vmatprep.subr.mxu0 0.0
    %165 = vmatpush2.xpose.msra.mxu0 0.0
    %166 = vmatprep.subr.mxu0 0.0
    %167 = vmatpush2.xpose.msra.mxu0 0.0
    %168 = vmatprep.subr.mxu0 0.0
    %169 = vmatpush2.xpose.msra.mxu0 0.0
    %170 = vmatprep.subr.mxu0 0.0
    %171 = vmatpush2.xpose.msra.mxu0 0.0
    %172 = vmatprep.subr.mxu0 0.0
    %173 = vmatpush2.xpose.msra.mxu0 0.0
    %174 = vmatprep.subr.mxu0 0.0
    %175 = vmatpush2.xpose.msra.mxu0 0.0
    %176 = vmatprep.subr.mxu0 0.0
    %177 = vmatpush2.xpose.msra.mxu0 0.0
    %178 = vmatprep.subr.mxu0 0.0
    %179 = vmatpush2.xpose.msra.mxu0 0.0
    %180 = vmatprep.subr.mxu0 0.0
    %181 = vmatpush2.xpose.msra.mxu0 0.0
    %182 = vmatprep.subr.mxu0 0.0
    %183 = vmatpush2.xpose.msra.mxu0 0.0
    %184 = vmatprep.subr.mxu0 0.0
    %185 = vmatpush2.xpose.msra.mxu0 0.0
    %186 = vmatprep.subr.mxu0 0.0
    %187 = vmatpush2.xpose.msra.mxu0 0.0
    %188 = vmatprep.subr.mxu0 0.0
    %189 = vmatpush2.xpose.msra.mxu0 0.0
    %190 = vmatprep.subr.mxu0 0.0
    %191 = vmatpush2.xpose.msra.mxu0 0.0
    %192 = vmatprep.subr.mxu0 0.0
    %193 = vmatpush2.xpose.msra.mxu0 0.0
    %194 = vmatprep.mubr.f32.mxu0 0.0
    %195 = vmatmul.mubr.f32.gmra.mxu0 %v68
    %v196 = vpop.f32.mrf.mxu0
    %v197 = vadd.f32 %v65, %v196
    %v198 = vpop.f32.mrf.mxu0
    %199 = vmatprep.mubr.f32.mxu0 0.0
    %200 = vmatmul.mubr.f32.gmra.mxu0 %v71
    %v201 = vpop.f32.mrf.mxu0
    %v202 = vadd.f32 %v65, %v201
    %v203 = vpop.f32.mrf.mxu0
    %204 = vmatprep.mubr.f32.mxu0 0.0
    %205 = vmatmul.mubr.f32.gmra.mxu0 %v74
    %v206 = vpop.f32.mrf.mxu0
    %v207 = vadd.f32 %v65, %v206
    %v208 = vpop.f32.mrf.mxu0
    %209 = vmatprep.mubr.f32.mxu0 0.0
    %210 = vmatmul.mubr.f32.gmra.mxu0 %v77
    %v211 = vpop.f32.mrf.mxu0
    %v212 = vadd.f32 %v65, %v211
    %v213 = vpop.f32.mrf.mxu0
    %214 = vmatprep.mubr.f32.mxu0 0.0
    %215 = vmatmul.mubr.f32.gmra.mxu0 %v80
    %v216 = vpop.f32.mrf.mxu0
    %v217 = vadd.f32 %v65, %v216
    %v218 = vpop.f32.mrf.mxu0
    %219 = vdwg.mxu0
    %v220 = vmax.f32 %v197, 0.0
    %v221 = vmax.f32 %v202, 0.0
    %v222 = vmax.f32 %v207, 0.0
    %v223 = vmax.f32 %v212, 0.0
    %v224 = vmax.f32 %v217, 0.0
    %v225 = vld [vmem:[%s2] sm:$0xff]
    %v226 = vld [vmem:[%s2 + $0x8] sm:$0xff]
    %s227 = sld [smem:[#allocation2 + $0x1]]
    %v228 = vstv %s227
    %vm229 = vcmask 293888
    %v231 = vsel %vm229, %v225, 0
    %v234 = vsel %vm229, %v226, 0
    %vm236 = vcmask 1043456
    %v238 = vsel %vm236, %v224, 0
    %240 = vmatprep.subr.mxu0 0.0
    %241 = vmatpush1.msra.mxu0 0.0
    %242 = vmatprep.subr.mxu0 0.0
    %243 = vmatpush1.msra.mxu0 0.0
    %244 = vmatprep.subr.mxu0 0.0
    %245 = vmatpush1.msra.mxu0 0.0
    %246 = vmatprep.subr.mxu0 0.0
    %247 = vmatpush1.msra.mxu0 0.0
    %248 = vmatprep.subr.mxu0 0.0
    %249 = vmatpush1.msra.mxu0 0.0
    %250 = vmatprep.subr.mxu0 0.0
    %251 = vmatpush1.msra.mxu0 0.0
    %252 = vmatprep.subr.mxu0 0.0
    %253 = vmatpush1.msra.mxu0 0.0
    %254 = vmatprep.subr.mxu0 0.0
    %255 = vmatpush1.msra.mxu0 0.0
    %256 = vmatprep.subr.mxu0 0.0
    %257 = vmatpush1.msra.mxu0 0.0
    %258 = vmatprep.subr.mxu0 0.0
    %259 = vmatpush1.msra.mxu0 0.0
    %260 = vmatprep.subr.mxu0 0.0
    %261 = vmatpush1.msra.mxu0 0.0
    %262 = vmatprep.subr.mxu0 0.0
    %263 = vmatpush1.msra.mxu0 %v238
    %264 = vmatprep.subr.mxu0 0.0
    %265 = vmatpush1.msra.mxu0 %v223
    %266 = vmatprep.subr.mxu0 0.0
    %267 = vmatpush1.msra.mxu0 %v222
    %268 = vmatprep.subr.mxu0 0.0
    %269 = vmatpush1.msra.mxu0 %v221
    %270 = vmatprep.subr.mxu0 0.0
    %271 = vmatpush1.msra.mxu0 %v220
    %272 = vmatprep.subr.mxu0 0.0
    %273 = vmatpush2.msra.mxu0 0.0
    %274 = vmatprep.subr.mxu0 0.0
    %275 = vmatpush2.msra.mxu0 0.0
    %276 = vmatprep.subr.mxu0 0.0
    %277 = vmatpush2.msra.mxu0 0.0
    %278 = vmatprep.subr.mxu0 0.0
    %279 = vmatpush2.msra.mxu0 0.0
    %280 = vmatprep.subr.mxu0 0.0
    %281 = vmatpush2.msra.mxu0 0.0
    %282 = vmatprep.subr.mxu0 0.0
    %283 = vmatpush2.msra.mxu0 0.0
    %284 = vmatprep.subr.mxu0 0.0
    %285 = vmatpush2.msra.mxu0 0.0
    %286 = vmatprep.subr.mxu0 0.0
    %287 = vmatpush2.msra.mxu0 0.0
    %288 = vmatprep.subr.mxu0 0.0
    %289 = vmatpush2.msra.mxu0 0.0
    %290 = vmatprep.subr.mxu0 0.0
    %291 = vmatpush2.msra.mxu0 0.0
    %292 = vmatprep.subr.mxu0 0.0
    %293 = vmatpush2.msra.mxu0 0.0
    %294 = vmatprep.subr.mxu0 0.0
    %295 = vmatpush2.msra.mxu0 0.0
    %296 = vmatprep.subr.mxu0 0.0
    %297 = vmatpush2.msra.mxu0 0.0
    %298 = vmatprep.subr.mxu0 0.0
    %299 = vmatpush2.msra.mxu0 0.0
    %300 = vmatprep.subr.mxu0 0.0
    %301 = vmatpush2.msra.mxu0 0.0
    %302 = vmatprep.subr.mxu0 0.0
    %303 = vmatpush2.msra.mxu0 0.0
    %304 = vmatprep.mubr.f32.mxu0 0.0
    %305 = vmatmul.mubr.f32.gmra.mxu0 %v231
    %v306 = vpop.f32.mrf.mxu0
    %v307 = vadd.f32 %v228, %v306
    %v308 = vpop.f32.mrf.mxu0
    %309 = vmatprep.mubr.f32.mxu0 0.0
    %310 = vmatmul.mubr.f32.gmra.mxu0 %v234
    %v311 = vpop.f32.mrf.mxu0
    %v312 = vadd.f32 %v228, %v311
    %v313 = vpop.f32.mrf.mxu0
    %314 = vdwg.mxu0
    %v315 = vmax.f32 %v307, 0.0
    %v316 = vmax.f32 %v312, 0.0
    %v317 = vld [vmem:[%s3] sm:$0xff]
    %v318 = vld [vmem:[%s6] sm:$0xff]
    %320 = vset.pattern.permute.xlu0 0
    %321 = vperm.xlu0 %320, %v318
    %v322 = vpop.permute.xlu0 %321
    %vm324 = vcmask 130048
    %v326 = vsel %vm324, %v317, 0
    %328 = vmatprep.subr.mxu0 0.0
    %329 = vmatpush1.msra.mxu0 0.0
    %330 = vmatprep.subr.mxu0 0.0
    %331 = vmatpush1.msra.mxu0 0.0
    %332 = vmatprep.subr.mxu0 0.0
    %333 = vmatpush1.msra.mxu0 0.0
    %334 = vmatprep.subr.mxu0 0.0
    %335 = vmatpush1.msra.mxu0 0.0
    %336 = vmatprep.subr.mxu0 0.0
    %337 = vmatpush1.msra.mxu0 0.0
    %338 = vmatprep.subr.mxu0 0.0
    %339 = vmatpush1.msra.mxu0 0.0
    %340 = vmatprep.subr.mxu0 0.0
    %341 = vmatpush1.msra.mxu0 0.0
    %342 = vmatprep.subr.mxu0 0.0
    %343 = vmatpush1.msra.mxu0 0.0
    %344 = vmatprep.subr.mxu0 0.0
    %345 = vmatpush1.msra.mxu0 0.0
    %346 = vmatprep.subr.mxu0 0.0
    %347 = vmatpush1.msra.mxu0 0.0
    %348 = vmatprep.subr.mxu0 0.0
    %349 = vmatpush1.msra.mxu0 0.0
    %350 = vmatprep.subr.mxu0 0.0
    %351 = vmatpush1.msra.mxu0 0.0
    %352 = vmatprep.subr.mxu0 0.0
    %353 = vmatpush1.msra.mxu0 0.0
    %354 = vmatprep.subr.mxu0 0.0
    %355 = vmatpush1.msra.mxu0 0.0
    %356 = vmatprep.subr.mxu0 0.0
    %357 = vmatpush1.msra.mxu0 %v316
    %358 = vmatprep.subr.mxu0 0.0
    %359 = vmatpush1.msra.mxu0 %v315
    %360 = vmatprep.subr.mxu0 0.0
    %361 = vmatpush2.msra.mxu0 0.0
    %362 = vmatprep.subr.mxu0 0.0
    %363 = vmatpush2.msra.mxu0 0.0
    %364 = vmatprep.subr.mxu0 0.0
    %365 = vmatpush2.msra.mxu0 0.0
    %366 = vmatprep.subr.mxu0 0.0
    %367 = vmatpush2.msra.mxu0 0.0
    %368 = vmatprep.subr.mxu0 0.0
    %369 = vmatpush2.msra.mxu0 0.0
    %370 = vmatprep.subr.mxu0 0.0
    %371 = vmatpush2.msra.mxu0 0.0
    %372 = vmatprep.subr.mxu0 0.0
    %373 = vmatpush2.msra.mxu0 0.0
    %374 = vmatprep.subr.mxu0 0.0
    %375 = vmatpush2.msra.mxu0 0.0
    %376 = vmatprep.subr.mxu0 0.0
    %377 = vmatpush2.msra.mxu0 0.0
    %378 = vmatprep.subr.mxu0 0.0
    %379 = vmatpush2.msra.mxu0 0.0
    %380 = vmatprep.subr.mxu0 0.0
    %381 = vmatpush2.msra.mxu0 0.0
    %382 = vmatprep.subr.mxu0 0.0
    %383 = vmatpush2.msra.mxu0 0.0
    %384 = vmatprep.subr.mxu0 0.0
    %385 = vmatpush2.msra.mxu0 0.0
    %386 = vmatprep.subr.mxu0 0.0
    %387 = vmatpush2.msra.mxu0 0.0
    %388 = vmatprep.subr.mxu0 0.0
    %389 = vmatpush2.msra.mxu0 0.0
    %390 = vmatprep.subr.mxu0 0.0
    %391 = vmatpush2.msra.mxu0 0.0
    %392 = vmatprep.mubr.f32.mxu0 0.0
    %393 = vmatmul.mubr.f32.gmra.mxu0 %v326
    %v394 = vpop.f32.mrf.mxu0
    %v395 = vadd.f32 %v322, %v394
    %v396 = vpop.f32.mrf.mxu0
    %397 = vdwg.mxu0
    %v398 = vmax.f32 %v395, 0.0
    %v399 = vld [vmem:[%s4] sm:$0xf]
    %v400 = vld [vmem:[%s7] sm:$0xf]
    %402 = vset.pattern.permute.xlu0 0
    %403 = vperm.xlu0 %402, %v400
    %v404 = vpop.permute.xlu0 %403
    %vm406 = vcmask 64512
    %v408 = vsel %vm406, %v399, 0
    %410 = vmatprep.subr.mxu0 0.0
    %411 = vmatpush1.msra.mxu0 0.0
    %412 = vmatprep.subr.mxu0 0.0
    %413 = vmatpush1.msra.mxu0 0.0
    %414 = vmatprep.subr.mxu0 0.0
    %415 = vmatpush1.msra.mxu0 0.0
    %416 = vmatprep.subr.mxu0 0.0
    %417 = vmatpush1.msra.mxu0 0.0
    %418 = vmatprep.subr.mxu0 0.0
    %419 = vmatpush1.msra.mxu0 0.0
    %420 = vmatprep.subr.mxu0 0.0
    %421 = vmatpush1.msra.mxu0 0.0
    %422 = vmatprep.subr.mxu0 0.0
    %423 = vmatpush1.msra.mxu0 0.0
    %424 = vmatprep.subr.mxu0 0.0
    %425 = vmatpush1.msra.mxu0 0.0
    %426 = vmatprep.subr.mxu0 0.0
    %427 = vmatpush1.msra.mxu0 0.0
    %428 = vmatprep.subr.mxu0 0.0
    %429 = vmatpush1.msra.mxu0 0.0
    %430 = vmatprep.subr.mxu0 0.0
    %431 = vmatpush1.msra.mxu0 0.0
    %432 = vmatprep.subr.mxu0 0.0
    %433 = vmatpush1.msra.mxu0 0.0
    %434 = vmatprep.subr.mxu0 0.0
    %435 = vmatpush1.msra.mxu0 0.0
    %436 = vmatprep.subr.mxu0 0.0
    %437 = vmatpush1.msra.mxu0 0.0
    %438 = vmatprep.subr.mxu0 0.0
    %439 = vmatpush1.msra.mxu0 0.0
    %440 = vmatprep.subr.mxu0 0.0
    %441 = vmatpush1.msra.mxu0 %v398
    %442 = vmatprep.subr.mxu0 0.0
    %443 = vmatpush2.msra.mxu0 0.0
    %444 = vmatprep.subr.mxu0 0.0
    %445 = vmatpush2.msra.mxu0 0.0
    %446 = vmatprep.subr.mxu0 0.0
    %447 = vmatpush2.msra.mxu0 0.0
    %448 = vmatprep.subr.mxu0 0.0
    %449 = vmatpush2.msra.mxu0 0.0
    %450 = vmatprep.subr.mxu0 0.0
    %451 = vmatpush2.msra.mxu0 0.0
    %452 = vmatprep.subr.mxu0 0.0
    %453 = vmatpush2.msra.mxu0 0.0
    %454 = vmatprep.subr.mxu0 0.0
    %455 = vmatpush2.msra.mxu0 0.0
    %456 = vmatprep.subr.mxu0 0.0
    %457 = vmatpush2.msra.mxu0 0.0
    %458 = vmatprep.subr.mxu0 0.0
    %459 = vmatpush2.msra.mxu0 0.0
    %460 = vmatprep.subr.mxu0 0.0
    %461 = vmatpush2.msra.mxu0 0.0
    %462 = vmatprep.subr.mxu0 0.0
    %463 = vmatpush2.msra.mxu0 0.0
    %464 = vmatprep.subr.mxu0 0.0
    %465 = vmatpush2.msra.mxu0 0.0
    %466 = vmatprep.subr.mxu0 0.0
    %467 = vmatpush2.msra.mxu0 0.0
    %468 = vmatprep.subr.mxu0 0.0
    %469 = vmatpush2.msra.mxu0 0.0
    %470 = vmatprep.subr.mxu0 0.0
    %471 = vmatpush2.msra.mxu0 0.0
    %472 = vmatprep.subr.mxu0 0.0
    %473 = vmatpush2.msra.mxu0 0.0
    %474 = vmatprep.mubr.f32.mxu0 0.0
    %475 = vmatmul.mubr.f32.gmra.mxu0 %v408
    %v476 = vpop.f32.mrf.mxu0
    %v477 = vadd.f32 %v404, %v476
    %v478 = vpop.f32.mrf.mxu0
    %479 = vdwg.mxu0
    %480 = vst [vmem:[#allocation5] sm:$0xf] %v477
    // Predicated region
    $region38: #{tpu_custom_call.1} parent=1 // pred_check
      _
    $region39: #{tpu_custom_call.1} parent=1 // pred_check_branch
      %482 = sbr.rel (0) target = $region41
    $region40: #{tpu_custom_call.1} parent=1 // pred_region
      %s484 = ssub.s32 64, 64
      %485 = vsyncadd [#allocation3], %s484
      %s487 = sshll.u32 [#allocation5], 4
      %s488 = int_to_ptr.vmem [resolvable:$true] %s487
      %490 = dma.vmem_to_hbm [thread:$0]  %s488, 64, %s8, [#allocation3]
    $region41: #{tpu_custom_call.1} parent=1 // pred_fallthru
      _
    // Predicated region
    $region42: #{tpu_custom_call.1} parent=1 // pred_check
      _
    $region43: #{tpu_custom_call.1} parent=1 // pred_check_branch
      %492 = sbr.rel (0) target = $region45
    $region44: #{tpu_custom_call.1} parent=1 // pred_region
      %493 = dma.done [#allocation3], 64
    $region45: #{tpu_custom_call.1} parent=1 // pred_fallthru
      _
    %494 = vsyncpa [#allocation3], 1
    %495 = vsyncpa [#allocation4], 1

</llo_original>
